<compile_context>
chip_gen: v5e
topology: v5e:2x2
jax: 0.10.0
libtpu: 0.0.40
codegen_flags: <defaults>
</compile_context>

<pallas_src>
import functools

import jax
import jax.numpy as jnp
from jax.experimental import pallas as pl
from jax.experimental.pallas import tpu as pltpu


def _round_up(x, m):
    return ((x + m - 1) // m) * m


def _focal_loss_kernel(x_ref, side_ref, out_ref, *, gamma, n_valid):
    # x_ref:    (C, T) logits in native dtype, classes on sublanes, rows on lanes.
    # side_ref: (2, T) f32; row 0 = target class id (as f32, exact), row 1 = alpha[target].
    # out_ref:  (1, 8, 128) f32; this tile's partial loss sum, broadcast (lane-dense store).
    x = x_ref[...].astype(jnp.float32)                       # (C, T)
    c, t = x.shape

    tgt = side_ref[0:1, :]                                   # (1, T) target id as f32
    alpha = side_ref[1:2, :]                                 # (1, T) alpha[target]

    # Target-class logit gathered in-kernel (no glue take_along_axis pass).
    cls = jax.lax.broadcasted_iota(jnp.int32, (c, t), 0).astype(jnp.float32)
    x_t = jnp.sum(jnp.where(cls == tgt, x, 0.0), axis=0, keepdims=True)    # (1, T)

    # Stable log softmax(x)[target] via log-sum-exp; all per-row vectors are lane-dense.
    m = jnp.max(x, axis=0, keepdims=True)                    # (1, T)
    denom = jnp.sum(jnp.exp(x - m), axis=0, keepdims=True)   # (1, T)
    log_p = x_t - m - jnp.log(denom)                         # (1, T)
    p = jnp.exp(log_p)                                       # (1, T)

    # (1 - p)^gamma; integer gamma (default 2) -> plain VPU multiplies, starting from w.
    # NOTE: -jnp.expm1(log_p) would be exact for p -> 1; 1 - p matches the PyTorch reference.
    w = 1.0 - p
    g = float(gamma)
    if g == round(g) and 1.0 <= g <= 8.0:
        wg = w
        for _ in range(int(round(g)) - 1):
            wg = wg * w
    elif g == 0.0:
        wg = jnp.ones_like(w)
    else:
        wg = jnp.power(w, g)                                 # non-integer gamma fallback

    loss = -(alpha * wg) * log_p                             # (1, T)

    # Ragged tail: the un-DMA'd part of the last block holds stale VMEM (possibly NaN/Inf).
    # Mask with a select so garbage never reaches the partial sum.
    col = jax.lax.broadcasted_iota(jnp.int32, (1, t), 1) + pl.program_id(0) * t
    loss = jnp.where(col < n_valid, loss, 0.0)

    out_ref[...] = jnp.full(out_ref.shape, jnp.sum(loss), dtype=jnp.float32)


def _focal_loss_jax(inputs, targets, alpha_flat, *, gamma, size_average):
    """Small-batch path (kernel/launch overhead not worth it)."""
    x = inputs.astype(jnp.float32)
    m = jnp.max(x, axis=1, keepdims=True)
    lse = m + jnp.log(jnp.sum(jnp.exp(x - m), axis=1, keepdims=True))
    x_t = jnp.take_along_axis(x, targets[:, None], axis=1)
    log_p = x_t - lse
    probs = jnp.exp(log_p)
    alpha = alpha_flat[targets][:, None]
    batch_loss = -alpha * jnp.power(1.0 - probs, gamma) * log_p
    return jnp.mean(batch_loss) if size_average else jnp.sum(batch_loss)


def _pick_tile_n(n, c, itemsize, vmem_budget_bytes):
    """Largest multiple-of-128 row tile whose double-buffered blocks fit the VMEM budget."""
    c_sl = _round_up(max(c, 1), 8)
    # 2x (double buffer) x [ logits block + side block (1..2 sublanes padded to 8, f32) ]
    bytes_per_col = 2 * (c_sl * itemsize + 8 * 4)
    t = vmem_budget_bytes // bytes_per_col
    t = max(128, (t // 128) * 128)
    t = min(t, 32768)                      # keep grid granularity / pipelining reasonable
    t = min(t, _round_up(n, 128))
    return int(t)


def focal_loss(inputs, targets, alpha_table, *, gamma=2.0, size_average=True,
               tile_n=None, use_kernel=None, vmem_budget_bytes=12 * 1024 * 1024):
    """Pallas focal loss forward.

    inputs:      (N, C) logits (f32 or bf16 -- fed to the kernel in native dtype)
    targets:     (N,) integer class ids
    alpha_table: (A,) or (A, 1) per-class scalar factors, A > max class id
    """
    n, c = inputs.shape
    targets = targets.reshape(-1).astype(jnp.int32)
    alpha_flat = alpha_table.reshape(-1).astype(jnp.float32)

    if use_kernel is None:
        use_kernel = n >= 512
    if not use_kernel:
        return _focal_loss_jax(inputs, targets, alpha_flat,
                               gamma=gamma, size_average=size_average)

    # Class-major layout: batch on the lane axis (lane-dense exp + lane-dense per-row chain).
    # If the producer can emit class-major logits directly, this transpose pass disappears.
    x_cm = jnp.transpose(inputs)                                   # (C, N), native dtype

    # Single lane-dense per-row side array: [target id (exact in f32); alpha[target]].
    side = jnp.stack([targets.astype(jnp.float32),
                      alpha_flat[targets]], axis=0)                # (2, N) f32

    if tile_n is None:
        tile_n = _pick_tile_n(n, c, jnp.dtype(inputs.dtype).itemsize, vmem_budget_bytes)
    else:
        tile_n = max(128, _round_up(int(tile_n), 128))
        tile_n = min(tile_n, _round_up(n, 128))

    num_tiles = pl.cdiv(n, tile_n)        # no row padding: ragged tail is masked in-kernel

    kernel = functools.partial(_focal_loss_kernel, gamma=float(gamma), n_valid=int(n))

    partials = pl.pallas_call(
        kernel,
        out_shape=jax.ShapeDtypeStruct((num_tiles, 8, 128), jnp.float32),
        grid_spec=pltpu.PrefetchScalarGridSpec(
            num_scalar_prefetch=0,
            grid=(num_tiles,),
            in_specs=[
                pl.BlockSpec((c, tile_n), lambda i: (0, i)),   # class-major logits tile
                pl.BlockSpec((2, tile_n), lambda i: (0, i)),   # lane-dense [target, alpha]
            ],
            out_specs=pl.BlockSpec((1, 8, 128), lambda i: (i, 0, 0)),
        ),
        compiler_params=pltpu.CompilerParams(
            dimension_semantics=("parallel",),        # independent tiles (v7x may use CORE_PARALLEL)
            vmem_limit_bytes=32 * 1024 * 1024,        # safe explicit budget on v5e/v6e/v7x
        ),
    )(x_cm, side)

    total = jnp.sum(partials[:, 0, 0])
    if size_average:
        return total / jnp.float32(n)                 # divide by the GLOBAL (unmasked) N
    return total


def focal_loss_ref(inputs, targets, alpha_table, *, gamma=2.0, size_average=True):
    """Pure-JAX reference mirroring the PyTorch forward (softmax -> gather -> log)."""
    p = jax.nn.softmax(inputs.astype(jnp.float32), axis=1)
    n = inputs.shape[0]
    t = targets.reshape(-1)
    probs = p[jnp.arange(n), t].reshape(n, 1)
    alpha = alpha_table.reshape(-1)[t].reshape(n, 1)
    batch_loss = -alpha * jnp.power(1.0 - probs, gamma) * jnp.log(probs)
    return jnp.mean(batch_loss) if size_average else jnp.sum(batch_loss)


if __name__ == "__main__":
    key = jax.random.PRNGKey(0)
    k_x, k_t = jax.random.split(key)

    N, C = 1000, 30   # class_num=30 per module default; N deliberately not a tile multiple
    inputs = jax.random.normal(k_x, (N, C), dtype=jnp.float32)
    targets = jax.random.randint(k_t, (N,), 0, C, dtype=jnp.int32)
    # alpha = ones(10000, 1), deterministic, matching the module __init__ default.
    alpha_table = jnp.ones((10000, 1), dtype=jnp.float32)

    # Small tile so the demo exercises multi-tile pipelining + the ragged-tail mask.
    loss_mean = focal_loss(inputs, targets, alpha_table, gamma=2.0, size_average=True,
                           tile_n=256, use_kernel=True)
    loss_mean = jax.block_until_ready(loss_mean)
    ref_mean = focal_loss_ref(inputs, targets, alpha_table, gamma=2.0, size_average=True)
    assert jnp.allclose(loss_mean, ref_mean, rtol=1e-5, atol=1e-5), (loss_mean, ref_mean)

    # size_average=False (sum reduction) path.
    loss_sum = focal_loss(inputs, targets, alpha_table, gamma=2.0, size_average=False,
                          tile_n=256, use_kernel=True)
    loss_sum = jax.block_until_ready(loss_sum)
    ref_sum = focal_loss_ref(inputs, targets, alpha_table, gamma=2.0, size_average=False)
    assert jnp.allclose(loss_sum, ref_sum, rtol=1e-5, atol=1e-2), (loss_sum, ref_sum)

    print("KERNEL_OK")
</pallas_src>

<mosaic_0001>
module attributes {stable_mosaic.version = 11 : i64} {
  func.func @_focal_loss_kernel(%arg0: i32, %arg1: memref<30x256xf32, #tpu.memory_space<vmem>>, %arg2: memref<2x256xf32, #tpu.memory_space<vmem>>, %arg3: memref<1x8x128xf32, #tpu.memory_space<vmem>>) attributes {dimension_semantics = [#tpu.dimension_semantics<parallel>], iteration_bounds = array<i64: 4>, scalar_prefetch = 0 : i64, scratch_operands = 0 : i64, tpu.core_type = #tpu.core_type<tc>, window_params = [{transform_indices = @transform_0, window_bounds = array<i64: 30, 256>}, {transform_indices = @transform_1, window_bounds = array<i64: 2, 256>}, {transform_indices = @transform_2, window_bounds = array<i64: 1, 8, 128>}]} {
    %c0 = arith.constant 0 : index
    %c0_0 = arith.constant 0 : index
    %0 = vector.load %arg1[%c0, %c0_0] : memref<30x256xf32, #tpu.memory_space<vmem>>, vector<30x256xf32>
    %c0_1 = arith.constant 0 : index
    %c0_2 = arith.constant 0 : index
    %1 = vector.load %arg2[%c0_1, %c0_2] : memref<2x256xf32, #tpu.memory_space<vmem>>, vector<1x256xf32>
    %c1 = arith.constant 1 : index
    %c0_3 = arith.constant 0 : index
    %2 = vector.load %arg2[%c1, %c0_3] : memref<2x256xf32, #tpu.memory_space<vmem>>, vector<1x256xf32>
    %3 = tpu.iota {dimensions = array<i32: 0>} : vector<30x256xi32>
    %4 = arith.sitofp %3 : vector<30x256xi32> to vector<30x256xf32>
    %5 = vector.broadcast %1 : vector<1x256xf32> to vector<30x256xf32>
    %6 = arith.cmpf oeq, %4, %5 : vector<30x256xf32>
    %cst = arith.constant 0.000000e+00 : f32
    %7 = vector.broadcast %cst : f32 to vector<30x256xf32>
    %8 = arith.select %6, %0, %7 : vector<30x256xi1>, vector<30x256xf32>
    %cst_4 = arith.constant dense<0.000000e+00> : vector<256xf32>
    %9 = vector.multi_reduction <add>, %8, %cst_4 [0] : vector<30x256xf32> to vector<256xf32>
    %10 = vector.shape_cast %9 : vector<256xf32> to vector<1x256xf32>
    %cst_5 = arith.constant dense<0xFF800000> : vector<256xf32>
    %11 = vector.multi_reduction <maximumf>, %0, %cst_5 [0] : vector<30x256xf32> to vector<256xf32>
    %12 = vector.shape_cast %11 : vector<256xf32> to vector<1x256xf32>
    %13 = vector.broadcast %12 : vector<1x256xf32> to vector<30x256xf32>
    %14 = arith.subf %0, %13 : vector<30x256xf32>
    %15 = math.exp %14 : vector<30x256xf32>
    %cst_6 = arith.constant dense<0.000000e+00> : vector<256xf32>
    %16 = vector.multi_reduction <add>, %15, %cst_6 [0] : vector<30x256xf32> to vector<256xf32>
    %17 = vector.shape_cast %16 : vector<256xf32> to vector<1x256xf32>
    %18 = arith.subf %10, %12 : vector<1x256xf32>
    %19 = math.log %17 : vector<1x256xf32>
    %20 = arith.subf %18, %19 : vector<1x256xf32>
    %21 = math.exp %20 : vector<1x256xf32>
    %cst_7 = arith.constant 1.000000e+00 : f32
    %22 = vector.broadcast %cst_7 : f32 to vector<1x256xf32>
    %23 = arith.subf %22, %21 : vector<1x256xf32>
    %24 = arith.mulf %23, %23 : vector<1x256xf32>
    %25 = arith.mulf %2, %24 : vector<1x256xf32>
    %cst_8 = arith.constant 0.000000e+00 : f32
    %26 = vector.broadcast %cst_8 : f32 to vector<1x256xf32>
    %27 = arith.subf %26, %25 : vector<1x256xf32>
    %28 = arith.mulf %27, %20 : vector<1x256xf32>
    %29 = tpu.iota {dimensions = array<i32: 1>} : vector<1x256xi32>
    %c256_i32 = arith.constant 256 : i32
    %30 = arith.muli %arg0, %c256_i32 : i32
    %31 = vector.broadcast %30 : i32 to vector<1x256xi32>
    %32 = arith.addi %29, %31 : vector<1x256xi32>
    %c1000_i32 = arith.constant 1000 : i32
    %33 = vector.broadcast %c1000_i32 : i32 to vector<1x256xi32>
    %34 = arith.cmpi slt, %32, %33 : vector<1x256xi32>
    %cst_9 = arith.constant 0.000000e+00 : f32
    %35 = vector.broadcast %cst_9 : f32 to vector<1x256xf32>
    %36 = arith.select %34, %28, %35 : vector<1x256xi1>, vector<1x256xf32>
    %37 = vector.shape_cast %36 : vector<1x256xf32> to vector<1x1x256xf32>
    %cst_10 = arith.constant dense<0.000000e+00> : vector<1xf32>
    %38 = vector.multi_reduction <add>, %37, %cst_10 [1, 2] : vector<1x1x256xf32> to vector<1xf32>
    %39 = vector.shape_cast %38 : vector<1xf32> to vector<1x1x1xf32>
    %40 = vector.extract %39[0, 0, 0] : f32 from vector<1x1x1xf32>
    %41 = vector.broadcast %40 : f32 to vector<1x8x128xf32>
    %c0_11 = arith.constant 0 : index
    %c0_12 = arith.constant 0 : index
    %c0_13 = arith.constant 0 : index
    %42 = vector.load %arg3[%c0_11, %c0_12, %c0_13] : memref<1x8x128xf32, #tpu.memory_space<vmem>>, vector<1x8x128xf32>
    tpu.vector_store %arg3[%c0_11, %c0_12, %c0_13], %41 {strides = array<i32>} : memref<1x8x128xf32, #tpu.memory_space<vmem>>, vector<1x8x128xf32>,
    return
  }
  func.func @transform_0(%arg0: i32) -> (i32, i32) {
    %c0_i32 = arith.constant 0 : i32
    %c0_i32_0 = arith.constant 0 : i32
    return %c0_i32, %arg0 : i32, i32
  }
  func.func @transform_1(%arg0: i32) -> (i32, i32) {
    %c0_i32 = arith.constant 0 : i32
    %c0_i32_0 = arith.constant 0 : i32
    return %c0_i32, %arg0 : i32, i32
  }
  func.func @transform_2(%arg0: i32) -> (i32, i32, i32) {
    %c0_i32 = arith.constant 0 : i32
    %c0_i32_0 = arith.constant 0 : i32
    %c0_i32_1 = arith.constant 0 : i32
    return %arg0, %c0_i32, %c0_i32_0 : i32, i32, i32
  }
}

</mosaic_0001>

<llo_original>
// kernel: tpu_custom_call.1
$region0: #{tpu_custom_call.1}
  #allocation0 [shape = 'u32[]', space=smem, size = 0x4, offset = 0x4, fixed_abs, tag = 'smem constant byte address 0x4 - core index']
  #allocation1 [shape = 'u32[72,128]{1,0:T(1,128)}', space=vmem, size = 0x9000, scoped, tag = 'internal scratch']
  %s0 = inlined_call_operand.hbm [shape: f32[30,1000], index: 0, kind: input, shape index: {}]
  %s1 = inlined_call_operand.hbm [shape: f32[2,1000], index: 1, kind: input, shape index: {}]
  %s2 = inlined_call_operand.hbm [shape: f32[4,8,128], index: 2, kind: output, shape index: {}]
  %s3 = sld [smem:[#allocation0]]
  $region49: #{tpu_custom_call.1} parent=0
    _
  %s5 = ssub.s32 1, %s3
  %s6 = scalar_select 0, %s5, %s3
  $region1: #{tpu_custom_call.1} parent=0
    #allocation2 [shape = 'u8[65536]{0}', space=vmem, size = 0x10000, scoped, tag = 'input window, operand 0']
    #allocation3 [shape = 's32[2]{0}', space=sflag, size = 0x8, scoped, tag = 'scoped memory for tpu_custom_call.1']
    #allocation4 [shape = 's32[2]{0}', space=sflag, size = 0x8, scoped, tag = 'scoped memory for tpu_custom_call.1']
    #allocation5 [shape = 'u8[4096]{0}', space=vmem, size = 0x1000, scoped, tag = 'input window, operand 1']
    #allocation6 [shape = 's32[2]{0}', space=sflag, size = 0x8, scoped, tag = 'scoped memory for tpu_custom_call.1']
    #allocation7 [shape = 'u8[8192]{0}', space=vmem, size = 0x2000, scoped, tag = 'output window, operand 0']
    %7 = vsyncpa [#allocation3], 0
    %s8 = scalar_lea.sflag [#allocation3], 1
    %9 = vsyncpa %s8, 0
    %10 = vsyncpa [#allocation6], 0
    %s11 = scalar_lea.sflag [#allocation6], 1
    %12 = vsyncpa %s11, 0
    %13 = vsyncpa [#allocation4], 0
    %s14 = scalar_lea.sflag [#allocation4], 1
    %15 = vsyncpa %s14, 0
    loop: start=0, step=1, limit=6
    $region2: #{tpu_custom_call.1} parent=1 // loop_pre_header
      _
    $region3: #{tpu_custom_call.1} parent=1 // loop_header
      %s17 = sphi 0, %s21
      %p18 = scmp.ge.s32.totalorder %s17, 6
      %s27 = sphi 0, %s29
      %s30 = sphi 0, %s27
      %s31 = sphi 0, %s30
      %s47 = sphi 0, %s31
      %s53 = sphi 0, %s55
      %s56 = sphi 0, %s53
      %s57 = sphi 0, %s56
      %s73 = sphi 0, %s57
      %s79 = sphi 0, %s81
      %s82 = sphi 0, %s79
      %s83 = sphi 0, %s82
      %s99 = sphi 0, %s83
    $region4: #{tpu_custom_call.1} parent=1 // loop_header_branch
      %20 = sbr.rel (%p18) target = $region8
    $region5: #{tpu_custom_call.1} parent=1 // loop_body
      %s22 = ssub.s32 %s17, 1
      %s23 = ssub.s32 %s17, 2
      %s24 = sadd.s32 %s17, 1
      %s25 = ssub.s32 %s17, %s24
      %p26 = scmp.eq.s32.totalorder %s25, 0
      %s28 = sadd.s32 %s27, 1
      %s29 = scalar_select %p26, %s27, %s28
      %p32 = pneg %p26
      %p33 = scmp.eq.s32.totalorder %s17, 3
      %p34 = por %p32, %p33
      %p35 = scmp.ne.s32.totalorder %s27, %s30
      %p36 = scmp.eq.s32.totalorder %s17, 0
      %p37 = por %p35, %p36
      %p38 = scmp.ne.s32.totalorder %s27, %s30
      %p39 = scmp.eq.s32.totalorder %s22, 3
      %p40 = por %p38, %p39
      %p41 = scmp.ne.s32.totalorder %s30, %s31
      %p42 = scmp.eq.s32.totalorder %s22, 0
      %p43 = por %p41, %p42
      %p44 = scmp.ne.s32.totalorder %s30, %s31
      %p45 = scmp.eq.s32.totalorder %s23, 3
      %p46 = por %p44, %p45
      %p48 = scmp.ne.s32.totalorder %s31, %s47
      %p49 = scmp.eq.s32.totalorder %s23, 0
      %p50 = por %p48, %p49
      %s51 = ssub.s32 %s17, %s24
      %p52 = scmp.eq.s32.totalorder %s51, 0
      %s54 = sadd.s32 %s53, 1
      %s55 = scalar_select %p52, %s53, %s54
      %p58 = pneg %p52
      %p59 = scmp.eq.s32.totalorder %s17, 3
      %p60 = por %p58, %p59
      %p61 = scmp.ne.s32.totalorder %s53, %s56
      %p62 = scmp.eq.s32.totalorder %s17, 0
      %p63 = por %p61, %p62
      %p64 = scmp.ne.s32.totalorder %s53, %s56
      %p65 = scmp.eq.s32.totalorder %s22, 3
      %p66 = por %p64, %p65
      %p67 = scmp.ne.s32.totalorder %s56, %s57
      %p68 = scmp.eq.s32.totalorder %s22, 0
      %p69 = por %p67, %p68
      %p70 = scmp.ne.s32.totalorder %s56, %s57
      %p71 = scmp.eq.s32.totalorder %s23, 3
      %p72 = por %p70, %p71
      %p74 = scmp.ne.s32.totalorder %s57, %s73
      %p75 = scmp.eq.s32.totalorder %s23, 0
      %p76 = por %p74, %p75
      %s77 = ssub.s32 %s17, %s24
      %p78 = scmp.eq.s32.totalorder %s77, 0
      %s80 = sadd.s32 %s79, 1
      %s81 = scalar_select %p78, %s79, %s80
      %p84 = pneg %p78
      %p85 = scmp.eq.s32.totalorder %s17, 3
      %p86 = por %p84, %p85
      %p87 = scmp.ne.s32.totalorder %s79, %s82
      %p88 = scmp.eq.s32.totalorder %s17, 0
      %p89 = por %p87, %p88
      %p90 = scmp.ne.s32.totalorder %s79, %s82
      %p91 = scmp.eq.s32.totalorder %s22, 3
      %p92 = por %p90, %p91
      %p93 = scmp.ne.s32.totalorder %s82, %s83
      %p94 = scmp.eq.s32.totalorder %s22, 0
      %p95 = por %p93, %p94
      %p96 = scmp.ne.s32.totalorder %s82, %s83
      %p97 = scmp.eq.s32.totalorder %s23, 3
      %p98 = por %p96, %p97
      %p100 = scmp.ne.s32.totalorder %s83, %s99
      %p101 = scmp.eq.s32.totalorder %s23, 0
      %p102 = por %p100, %p101
      %p103 = scmp.le.s32.totalorder 1, %s17
      %p104 = scmp.lt.s32.totalorder %s17, 5
      %p105 = pnand %p103, %p104
      %p106 = pneg %p105
      // Predicated region
      $region9: #{tpu_custom_call.1} parent=5 // pred_check
        _
      $region10: #{tpu_custom_call.1} parent=5 // pred_check_branch
        %108 = sbr.rel (%p105) target = $region12
      $region11: #{tpu_custom_call.1} parent=5 // pred_region
        %s109 = ssub.s32 %s17, 1
      $region12: #{tpu_custom_call.1} parent=5 // pred_fallthru
        _
      %p110 = scmp.lt.s32.totalorder %s17, 4
      // Predicated region
      $region13: #{tpu_custom_call.1} parent=5 // pred_check
        %p111 = pneg %p110
      $region14: #{tpu_custom_call.1} parent=5 // pred_check_branch
        %113 = sbr.rel (%p111) target = $region16
      $region15: #{tpu_custom_call.1} parent=5 // pred_region
        // Predicated region
        $region17: #{tpu_custom_call.1} parent=15 // pred_check
          %p114 = pneg %p37
        $region18: #{tpu_custom_call.1} parent=15 // pred_check_branch
          %116 = sbr.rel (%p114) target = $region20
        $region19: #{tpu_custom_call.1} parent=15 // pred_region
          %s117 = sand.u32 %s27, 1
          %s118 = scalar_lea.sflag [#allocation3], %s117
          %s119 = sand.u32 %s27, 1
          %s120 = smul.addr %s119, 64
          %s121 = scalar_lea.vmem [#allocation2], %s120
          %s122 = smul.u32 2, %s17
          %124 = vsyncadd %s118, 0
          %s125 = smul.addr %s122, 8
          %s126 = scalar_lea.hbm %s0, %s125
          %s127 = sshll.u32 %s126, 4
          %s128 = int_to_ptr.hbm [resolvable:$true] %s127
          %s129 = sshll.u32 %s121, 4
          %s130 = int_to_ptr.vmem [resolvable:$true] %s129
          %135 = dma.hbm_to_vmem [thread:$0]  %s128, 1024, %s130, %s118, 1024, 256, 16
        $region20: #{tpu_custom_call.1} parent=15 // pred_fallthru
          _
        // Predicated region
        $region21: #{tpu_custom_call.1} parent=15 // pred_check
          %p136 = pneg %p63
        $region22: #{tpu_custom_call.1} parent=15 // pred_check_branch
          %138 = sbr.rel (%p136) target = $region24
        $region23: #{tpu_custom_call.1} parent=15 // pred_region
          %s139 = sand.u32 %s53, 1
          %s140 = scalar_lea.sflag [#allocation6], %s139
          %s141 = sand.u32 %s53, 1
          %s142 = smul.addr %s141, 4
          %s143 = scalar_lea.vmem [#allocation5], %s142
          %s144 = smul.u32 2, %s17
          %146 = vsyncadd %s140, 0
          %s147 = smul.addr %s144, 2
          %s148 = scalar_lea.hbm %s1, %s147
          %s150 = sshll.u32 %s148, 4
          %s151 = int_to_ptr.hbm [resolvable:$true] %s150
          %s152 = sshll.u32 %s143, 4
          %s153 = int_to_ptr.vmem [resolvable:$true] %s152
          %155 = dma.hbm_to_vmem [thread:$0]  %s151, 64, %s153, %s140
        $region24: #{tpu_custom_call.1} parent=15 // pred_fallthru
          _
      $region16: #{tpu_custom_call.1} parent=5 // pred_fallthru
        _
      %p156 = scmp.le.s32.totalorder 1, %s17
      %p157 = scmp.lt.s32.totalorder %s17, 5
      %p158 = pnand %p156, %p157
      %p159 = pneg %p158
      // Predicated region
      $region25: #{tpu_custom_call.1} parent=5 // pred_check
        _
      $region26: #{tpu_custom_call.1} parent=5 // pred_check_branch
        %161 = sbr.rel (%p158) target = $region28
      $region27: #{tpu_custom_call.1} parent=5 // pred_region
        %s162 = ssub.s32 %s17, 1
        %s163 = sand.u32 %s30, 1
        %s164 = scalar_lea.sflag [#allocation3], %s163
        %s165 = sand.u32 %s30, 1
        %s166 = smul.addr %s165, 64
        %s167 = scalar_lea.vmem [#allocation2], %s166
        // Predicated region
        $region29: #{tpu_custom_call.1} parent=27 // pred_check
          %p168 = pneg %p43
        $region30: #{tpu_custom_call.1} parent=27 // pred_check_branch
          %170 = sbr.rel (%p168) target = $region32
        $region31: #{tpu_custom_call.1} parent=27 // pred_region
          %172 = dma.done %s164, 1024
        $region32: #{tpu_custom_call.1} parent=27 // pred_fallthru
          _
        %s173 = sand.u32 %s56, 1
        %s174 = scalar_lea.sflag [#allocation6], %s173
        %s175 = sand.u32 %s56, 1
        %s176 = smul.addr %s175, 4
        %s177 = scalar_lea.vmem [#allocation5], %s176
        // Predicated region
        $region33: #{tpu_custom_call.1} parent=27 // pred_check
          %p178 = pneg %p69
        $region34: #{tpu_custom_call.1} parent=27 // pred_check_branch
          %180 = sbr.rel (%p178) target = $region36
        $region35: #{tpu_custom_call.1} parent=27 // pred_region
          %182 = dma.done %s174, 64
        $region36: #{tpu_custom_call.1} parent=27 // pred_fallthru
          _
        %s183 = sand.u32 %s30, 1
        %s184 = scalar_lea.sflag [#allocation3], %s183
        %s185 = sand.u32 %s30, 1
        %s186 = smul.addr %s185, 64
        %s187 = scalar_lea.vmem [#allocation2], %s186
        %p188 = pneg %p43
        %p189 = pneg %p40
        %s190 = sand.u32 %s56, 1
        %s191 = scalar_lea.sflag [#allocation6], %s190
        %s192 = sand.u32 %s56, 1
        %s193 = smul.addr %s192, 4
        %s194 = scalar_lea.vmem [#allocation5], %s193
        %p195 = pneg %p69
        %p196 = pneg %p66
        %p197 = pneg %p95
        %p198 = pneg %p92
        %s199 = sand.u32 %s82, 1
        %s200 = scalar_lea.sflag [#allocation4], %s199
        %s201 = sand.u32 %s82, 1
        %s202 = smul.addr %s201, 8
        %s203 = scalar_lea.vmem [#allocation7], %s202
        %s204 = smul.u32 2, %s22
        %s205 = smul.u32 2, %s22
        %v206 = vld [vmem:[%s167] sm:$0xff]
        %v207 = vld [vmem:[%s167 + $0x8] sm:$0xff]
        %v208 = vld [vmem:[%s167 + $0x10] sm:$0xff]
        %v209 = vld [vmem:[%s167 + $0x18] sm:$0xff]
        %v210 = vld [vmem:[%s167 + $0x20] sm:$0xff]
        %v211 = vld [vmem:[%s167 + $0x28] sm:$0xff]
        %v212 = vld [vmem:[%s167 + $0x30] sm:$0x3f]
        %v213 = vld [vmem:[%s167 + $0x38] sm:$0x3f]
        %v214 = vld [vmem:[%s177] ss:$2 sm:$0x3]
        %s215 = scalar_lea.vmem %s177, 1 [#allocation5]
        %v216 = vld [vmem:[%s215] ss:$2 sm:$0x3]
        %v217 = vlaneseq
        %v218 = vshrl.u32 %v217, 7
        %v219 = vadd.s32 %v218, 8
        %v220 = vadd.s32 %v218, 16
        %v221 = vadd.s32 %v218, 24
        %v222 = vcvt.s32.f32 %v218
        %v223 = vcvt.s32.f32 %v219
        %v224 = vcvt.s32.f32 %v220
        %v225 = vcvt.s32.f32 %v221
        %v227 = vperm.slane %v214, 0
        %v228 = vperm.slane %v214, 1
        %vm231 = vcmp.eq.f32.partialorder %v222, %v227
        %vm232 = vcmp.eq.f32.partialorder %v222, %v228
        %vm233 = vcmp.eq.f32.partialorder %v223, %v227
        %vm234 = vcmp.eq.f32.partialorder %v223, %v228
        %vm235 = vcmp.eq.f32.partialorder %v224, %v227
        %vm236 = vcmp.eq.f32.partialorder %v224, %v228
        %vm237 = vcmp.eq.f32.partialorder %v225, %v227
        %vm238 = vcmp.eq.f32.partialorder %v225, %v228
        %v239 = vsel %vm231, %v206, 0.0
        %v240 = vsel %vm232, %v207, 0.0
        %v241 = vsel %vm233, %v208, 0.0
        %v242 = vsel %vm234, %v209, 0.0
        %v243 = vsel %vm235, %v210, 0.0
        %v244 = vsel %vm236, %v211, 0.0
        %v245 = vsel %vm237, %v212, 0.0
        %v246 = vsel %vm238, %v213, 0.0
        %v247 = vadd.f32 %v239, %v241
        %v248 = vadd.f32 %v247, %v243
        %vm249 = vcmask 1045504
        %v250 = vsel %vm249, %v245, 0.0
        %v251 = vadd.f32 %v248, %v250
        %v252 = vrot.slane %v251, 4
        %v253 = vadd.f32 %v251, %v252
        %v254 = vrot.slane %v253, 2
        %v255 = vadd.f32 %v253, %v254
        %v256 = vrot.slane %v255, 1
        %v257 = vadd.f32 %v255, %v256
        %v258 = vadd.f32 %v240, %v242
        %v259 = vadd.f32 %v258, %v244
        %v260 = vsel %vm249, %v246, 0.0
        %v261 = vadd.f32 %v259, %v260
        %v262 = vrot.slane %v261, 4
        %v263 = vadd.f32 %v261, %v262
        %v264 = vrot.slane %v263, 2
        %v265 = vadd.f32 %v263, %v264
        %v266 = vrot.slane %v265, 1
        %v267 = vadd.f32 %v265, %v266
        %v268 = vmax.f32 %v206, %v210
        %v269 = vsel %vm249, %v212, -inf
        %v270 = vmax.f32 %v208, %v269
        %v271 = vmax.f32 %v268, %v270
        %v272 = vrot.slane %v271, 4
        %v273 = vmax.f32 %v271, %v272
        %v274 = vrot.slane %v273, 2
        %v275 = vmax.f32 %v273, %v274
        %v276 = vrot.slane %v275, 1
        %v277 = vmax.f32 %v275, %v276
        %v278 = vmax.f32 %v207, %v211
        %v279 = vsel %vm249, %v213, -inf
        %v280 = vmax.f32 %v209, %v279
        %v281 = vmax.f32 %v278, %v280
        %v282 = vrot.slane %v281, 4
        %v283 = vmax.f32 %v281, %v282
        %v284 = vrot.slane %v283, 2
        %v285 = vmax.f32 %v283, %v284
        %v286 = vrot.slane %v285, 1
        %v287 = vmax.f32 %v285, %v286
        %v288 = vsub.f32 %v206, %v277
        %v289 = vsub.f32 %v207, %v287
        %v290 = vsub.f32 %v208, %v277
        %v291 = vsub.f32 %v209, %v287
        %v292 = vsub.f32 %v210, %v277
        %v293 = vsub.f32 %v211, %v287
        %v294 = vsub.f32 %v212, %v277
        %v295 = vsub.f32 %v213, %v287
        %v296 = vmul.f32 %v288, 1.442695
        %v297 = vpow.pop %v296
        %v298 = vmul.f32 %v289, 1.442695
        %v299 = vpow.pop %v298
        %v300 = vmul.f32 %v290, 1.442695
        %v301 = vpow.pop %v300
        %v302 = vmul.f32 %v291, 1.442695
        %v303 = vpow.pop %v302
        %v304 = vmul.f32 %v292, 1.442695
        %v305 = vpow.pop %v304
        %v306 = vmul.f32 %v293, 1.442695
        %v307 = vpow.pop %v306
        %v308 = vmul.f32 %v294, 1.442695
        %v309 = vpow.pop %v308
        %v310 = vmul.f32 %v295, 1.442695
        %v311 = vpow.pop %v310
        %v312 = vadd.f32 %v297, %v301
        %v313 = vadd.f32 %v312, %v305
        %v314 = vsel %vm249, %v309, 0.0
        %v315 = vadd.f32 %v313, %v314
        %v316 = vrot.slane %v315, 4
        %v317 = vadd.f32 %v315, %v316
        %v318 = vrot.slane %v317, 2
        %v319 = vadd.f32 %v317, %v318
        %v320 = vrot.slane %v319, 1
        %v321 = vadd.f32 %v319, %v320
        %v322 = vadd.f32 %v299, %v303
        %v323 = vadd.f32 %v322, %v307
        %v324 = vsel %vm249, %v311, 0.0
        %v325 = vadd.f32 %v323, %v324
        %v326 = vrot.slane %v325, 4
        %v327 = vadd.f32 %v325, %v326
        %v328 = vrot.slane %v327, 2
        %v329 = vadd.f32 %v327, %v328
        %v330 = vrot.slane %v329, 1
        %v331 = vadd.f32 %v329, %v330
        %v332 = vsub.f32 %v257, %v277
        %v333 = vsub.f32 %v267, %v287
        %v334 = vlog2.pop %v321
        %v335 = vmul.f32 %v334, 0.6931472
        %v336 = vlog2.pop %v331
        %v337 = vmul.f32 %v336, 0.6931472
        %v338 = vsub.f32 %v332, %v335
        %v339 = vsub.f32 %v333, %v337
        %v340 = vmul.f32 %v338, 1.442695
        %v341 = vpow.pop %v340
        %v342 = vmul.f32 %v339, 1.442695
        %v343 = vpow.pop %v342
        %v344 = vsub.f32 1.0, %v341
        %v345 = vsub.f32 1.0, %v343
        %v346 = vmul.f32 %v344, %v344
        %v347 = vmul.f32 %v345, %v345
        %v350 = vrot.slane %v347, 7
        %vm351 = vcmask 1040384
        %v352 = vsel %vm351, %v346, %v350
        %v354 = vmul.f32 %v216, %v352
        %v355 = vsub.f32 0.0, %v354
        %v358 = vrot.slane %v339, 7
        %v359 = vsel %vm351, %v338, %v358
        %v361 = vmul.f32 %v355, %v359
        %v362 = vlaneseq
        %v363 = vand.u32 %v362, 127
        %v364 = vadd.s32 %v363, 128
        %s365 = smul.u32 %s22, 256
        %v366 = vstv %s365
        %v367 = vadd.s32 %v363, %v366
        %v368 = vadd.s32 %v364, %v366
        %vm369 = vcmp.lt.s32.totalorder %v367, 1000
        %vm370 = vcmp.lt.s32.totalorder %v368, 1000
        %v372 = vperm.slane %v361, 0
        %v373 = vperm.slane %v361, 1
        %v376 = vsel %vm369, %v372, 0.0
        %v377 = vsel %vm370, %v373, 0.0
        %v378 = vsel %vm351, %v376, 0.0
        %v379 = vsel %vm351, %v377, 0.0
        %v380 = vadd.f32 %v378, %v379
        %381 = vadd.xlane.f32.xlu0 %v380
        %v382 = vpop.xlane.xlu0 %381
        %v383 = vrot.slane %v382, 4
        %v384 = vadd.f32 %v382, %v383
        %v385 = vrot.slane %v384, 2
        %v386 = vadd.f32 %v384, %v385
        %v387 = vrot.slane %v386, 1
        %v388 = vadd.f32 %v386, %v387
        %s389 = vtos %v388
        %v390 = vstv %s389
        %391 = vst [vmem:[%s203] sm:$0xff] %v390
        %s392 = sand.u32 %s82, 1
        %s393 = scalar_lea.sflag [#allocation4], %s392
        %s394 = sand.u32 %s82, 1
        %s395 = smul.addr %s394, 8
        %s396 = scalar_lea.vmem [#allocation7], %s395
        // Predicated region
        $region37: #{tpu_custom_call.1} parent=27 // pred_check
          %p397 = pneg %p92
        $region38: #{tpu_custom_call.1} parent=27 // pred_check_branch
          %399 = sbr.rel (%p397) target = $region40
        $region39: #{tpu_custom_call.1} parent=27 // pred_region
          %401 = vsyncadd %s393, 0
          %s402 = smul.addr %s22, 8
          %s403 = scalar_lea.hbm %s2, %s402
          %s405 = sshll.u32 %s396, 4
          %s406 = int_to_ptr.vmem [resolvable:$true] %s405
          %s407 = sshll.u32 %s403, 4
          %s408 = int_to_ptr.hbm [resolvable:$true] %s407
          %410 = dma.vmem_to_hbm [thread:$0]  %s406, 128, %s408, %s393
        $region40: #{tpu_custom_call.1} parent=27 // pred_fallthru
          _
      $region28: #{tpu_custom_call.1} parent=5 // pred_fallthru
        _
      %p411 = scmp.le.s32.totalorder 2, %s17
      // Predicated region
      $region41: #{tpu_custom_call.1} parent=5 // pred_check
        %p412 = pneg %p411
      $region42: #{tpu_custom_call.1} parent=5 // pred_check_branch
        %414 = sbr.rel (%p412) target = $region44
      $region43: #{tpu_custom_call.1} parent=5 // pred_region
        %s415 = ssub.s32 %s17, 2
        // Predicated region
        $region45: #{tpu_custom_call.1} parent=43 // pred_check
          %p416 = pneg %p98
        $region46: #{tpu_custom_call.1} parent=43 // pred_check_branch
          %418 = sbr.rel (%p416) target = $region48
        $region47: #{tpu_custom_call.1} parent=43 // pred_region
          %s419 = sand.u32 %s83, 1
          %s420 = scalar_lea.sflag [#allocation4], %s419
          %s421 = sand.u32 %s83, 1
          %s422 = smul.addr %s421, 8
          %s423 = scalar_lea.vmem [#allocation7], %s422
          %425 = dma.done %s420, 128
        $region48: #{tpu_custom_call.1} parent=43 // pred_fallthru
          _
      $region44: #{tpu_custom_call.1} parent=5 // pred_fallthru
        _
    $region6: #{tpu_custom_call.1} parent=1 // loop_footer
      %s21 = sadd.s32 1, %s17
    $region7: #{tpu_custom_call.1} parent=1 // loop_footer_branch
      %16 = sbr.rel target = $region3
    $region8: #{tpu_custom_call.1} parent=1 // loop_exit
      _
    %426 = vsyncpa [#allocation3], 1
    %s427 = scalar_lea.sflag [#allocation3], 1
    %428 = vsyncpa %s427, 1
    %429 = vsyncpa [#allocation6], 1
    %s430 = scalar_lea.sflag [#allocation6], 1
    %431 = vsyncpa %s430, 1
    %432 = vsyncpa [#allocation4], 1
    %s433 = scalar_lea.sflag [#allocation4], 1
    %434 = vsyncpa %s433, 1

</llo_original>
